<compile_context>
chip_gen: v6e
topology: v6e:2x2x1
jax: 0.10.0
libtpu: 0.0.40
codegen_flags: <defaults>
</compile_context>

<pallas_src>
import functools

import jax
import jax.numpy as jnp
from jax import lax
from jax.experimental import pallas as pl
from jax.experimental.pallas import tpu as pltpu

NEG_SLOPE = 0.01  # PyTorch nn.LeakyReLU default


def _leaky_relu(x):
    return jnp.where(x > 0, x, NEG_SLOPE * x)


def _fused_conv_block_kernel(x_ref, w1_ref, b1_ref, w2_ref, b2_ref, o_ref, *,
                             kernel_size, dilation, pad1, pad2,
                             b_tile, l_in, l1, l2, use_bf16):
    # x_ref : (b_tile, C, L)      input slab (NCL)
    # w*_ref: (C, K*C)            tap-folded weights
    # b*_ref: (C, 1)
    # o_ref : (1, C, b_tile*L2)   lane-dense output slab (batch folded into lanes)
    f32 = jnp.float32
    mm_dtype = jnp.bfloat16 if use_bf16 else f32
    c = o_ref.shape[1]

    w1f = w1_ref[...].astype(mm_dtype)
    w2f = w2_ref[...].astype(mm_dtype)
    b1 = b1_ref[...].astype(f32)
    b2 = b2_ref[...].astype(f32)

    # ---- layer 1: LeakyReLU -> dilated Conv1d (K taps folded into one MXU dot) ----
    halo1 = jnp.zeros((c, pad1), f32) if pad1 > 0 else None
    cols = []
    for b in range(b_tile):                                           # static unroll
        xb = _leaky_relu(x_ref[b].astype(f32))                        # (C, L)
        if pad1 > 0:
            xb = jnp.concatenate([halo1, xb, halo1], axis=1)          # (C, L+2*pad1)
        taps = [xb[:, t * dilation:t * dilation + l1] for t in range(kernel_size)]
        cols.append(jnp.concatenate(taps, axis=0))                    # (K*C, L1)
    win1 = cols[0] if b_tile == 1 else jnp.concatenate(cols, axis=1)  # (K*C, B*L1)
    h1 = jnp.dot(w1f, win1.astype(mm_dtype),
                 preferred_element_type=jnp.float32) + b1             # (C, B*L1)

    # ---- layer 2: LeakyReLU -> Conv1d (dilation=1); h1 never leaves registers ----
    h1 = _leaky_relu(h1)
    halo2 = jnp.zeros((c, pad2), f32) if pad2 > 0 else None
    cols = []
    for b in range(b_tile):
        hb = h1[:, b * l1:(b + 1) * l1]                               # (C, L1)
        if pad2 > 0:
            hb = jnp.concatenate([halo2, hb, halo2], axis=1)          # (C, L1+2*pad2)
        taps = [hb[:, t:t + l2] for t in range(kernel_size)]
        cols.append(jnp.concatenate(taps, axis=0))                    # (K*C, L2)
    win2 = cols[0] if b_tile == 1 else jnp.concatenate(cols, axis=1)  # (K*C, B*L2)
    out = jnp.dot(w2f, win2.astype(mm_dtype),
                  preferred_element_type=jnp.float32) + b2            # (C, B*L2)

    o_ref[0] = out.astype(o_ref.dtype)


def conv_block_1d(x_ncl, params, *, kernel_size, dilation, use_bf16=False):
    """Fused ConvBlock1d forward.  x_ncl: (N, C, L) like PyTorch; returns (N, C, L_out)."""
    w1, b1, w2, b2 = params
    n, c, l = x_ncl.shape
    pad1 = (kernel_size - 1) * dilation // 2
    pad2 = (kernel_size - 1) // 2
    l1 = l + 2 * pad1 - dilation * (kernel_size - 1)
    l2 = l1 + 2 * pad2 - (kernel_size - 1)

    # Fold the K taps into the contraction dim: (C_out, C_in, K) -> (C_out, K*C_in).
    w1f = jnp.transpose(w1, (0, 2, 1)).reshape(c, kernel_size * c)
    w2f = jnp.transpose(w2, (0, 2, 1)).reshape(c, kernel_size * c)
    b1c = b1.reshape(c, 1)
    b2c = b2.reshape(c, 1)

    # Batch tile: fatten the per-step lane dim (lane-dense stores + amortized
    # per-grid-step overhead) while bounding the static unroll / vreg pressure.
    cols = max(l + 2 * pad1, l1 + 2 * pad2, l2)
    b_tile = max(1, min(n, 8, 4096 // max(cols, 1)))
    n_tiles = -(-n // b_tile)
    n_pad = n_tiles * b_tile
    if n_pad != n:
        x_ncl = jnp.pad(x_ncl, ((0, n_pad - n), (0, 0), (0, 0)))

    kernel = functools.partial(
        _fused_conv_block_kernel, kernel_size=kernel_size, dilation=dilation,
        pad1=pad1, pad2=pad2, b_tile=b_tile, l_in=l, l1=l1, l2=l2,
        use_bf16=use_bf16)

    # TODO(synk): for production-length L, add an L-tile grid axis with a halo of
    # dilation*(K-1) + (K-1), accumulate into VMEM scratch, and set
    # vmem_limit_bytes explicitly for v7x's 64 MiB VMEM budget; at these shapes
    # one (C, B_TILE*L) slab per step is tiny.
    out_flat = pl.pallas_call(
        kernel,
        out_shape=jax.ShapeDtypeStruct((n_tiles, c, b_tile * l2), x_ncl.dtype),
        grid_spec=pltpu.PrefetchScalarGridSpec(
            num_scalar_prefetch=0,
            grid=(n_tiles,),
            in_specs=[
                pl.BlockSpec((b_tile, c, l), lambda i: (i, 0, 0)),
                pl.BlockSpec((c, kernel_size * c), lambda i: (0, 0)),
                pl.BlockSpec((c, 1), lambda i: (0, 0)),
                pl.BlockSpec((c, kernel_size * c), lambda i: (0, 0)),
                pl.BlockSpec((c, 1), lambda i: (0, 0)),
            ],
            out_specs=pl.BlockSpec((1, c, b_tile * l2), lambda i: (i, 0, 0)),
        ),
        compiler_params=pltpu.CompilerParams(dimension_semantics=("parallel",)),
    )(x_ncl, w1f, b1c, w2f, b2c)

    # Layout plumbing back to PyTorch NCL (pure XLA on a tiny tensor, not compute).
    out = out_flat.reshape(n_tiles, c, b_tile, l2)
    out = jnp.transpose(out, (0, 2, 1, 3)).reshape(n_pad, c, l2)
    return out[:n]


def _reference(x_ncl, params, *, kernel_size, dilation):
    """Pure-JAX reference mirroring the PyTorch module exactly."""
    w1, b1, w2, b2 = params
    pad1 = (kernel_size - 1) * dilation // 2
    pad2 = (kernel_size - 1) // 2
    dn = ("NCH", "OIH", "NCH")

    y = _leaky_relu(x_ncl)
    y = lax.conv_general_dilated(y, w1, window_strides=(1,), padding=[(pad1, pad1)],
                                 rhs_dilation=(dilation,), dimension_numbers=dn)
    y = y + b1[None, :, None]
    y = _leaky_relu(y)
    y = lax.conv_general_dilated(y, w2, window_strides=(1,), padding=[(pad2, pad2)],
                                 rhs_dilation=(1,), dimension_numbers=dn)
    y = y + b2[None, :, None]
    return y


if __name__ == "__main__":
    hidden_size = 32
    kernel_size = 3
    dilation = 2
    batch = 2
    length = 16

    key = jax.random.PRNGKey(0)
    k_x, k_w1, k_b1, k_w2, k_b2 = jax.random.split(key, 5)

    # Deterministic parameter init (PyTorch Conv1d weight layout: (C_out, C_in, K)).
    scale = 1.0 / (hidden_size * kernel_size) ** 0.5
    w1 = jax.random.uniform(k_w1, (hidden_size, hidden_size, kernel_size),
                            jnp.float32, -scale, scale)
    b1 = jax.random.uniform(k_b1, (hidden_size,), jnp.float32, -scale, scale)
    w2 = jax.random.uniform(k_w2, (hidden_size, hidden_size, kernel_size),
                            jnp.float32, -scale, scale)
    b2 = jax.random.uniform(k_b2, (hidden_size,), jnp.float32, -scale, scale)
    params = (w1, b1, w2, b2)

    x = jax.random.normal(k_x, (batch, hidden_size, length), jnp.float32)  # NCL, like PyTorch

    out = conv_block_1d(x, params, kernel_size=kernel_size, dilation=dilation)
    out = jax.block_until_ready(out)

    ref = _reference(x, params, kernel_size=kernel_size, dilation=dilation)
    assert out.shape == ref.shape, (out.shape, ref.shape)
    assert jnp.allclose(out, ref, atol=1e-4, rtol=1e-4), float(jnp.abs(out - ref).max())

    print("KERNEL_OK")
</pallas_src>

<mosaic_0001>
module attributes {stable_mosaic.version = 11 : i64} {
  func.func @_fused_conv_block_kernel(%arg0: i32, %arg1: memref<2x32x16xf32, #tpu.memory_space<vmem>>, %arg2: memref<32x96xf32, #tpu.memory_space<vmem>>, %arg3: memref<32x1xf32, #tpu.memory_space<vmem>>, %arg4: memref<32x96xf32, #tpu.memory_space<vmem>>, %arg5: memref<32x1xf32, #tpu.memory_space<vmem>>, %arg6: memref<1x32x32xf32, #tpu.memory_space<vmem>>) attributes {dimension_semantics = [#tpu.dimension_semantics<parallel>], iteration_bounds = array<i64: 1>, scalar_prefetch = 0 : i64, scratch_operands = 0 : i64, tpu.core_type = #tpu.core_type<tc>, window_params = [{transform_indices = @transform_0, window_bounds = array<i64: 2, 32, 16>}, {pipeline_mode = #tpu.pipeline_mode<synchronous>, transform_indices = @transform_1, window_bounds = array<i64: 32, 96>}, {pipeline_mode = #tpu.pipeline_mode<synchronous>, transform_indices = @transform_2, window_bounds = array<i64: 32, 1>}, {pipeline_mode = #tpu.pipeline_mode<synchronous>, transform_indices = @transform_3, window_bounds = array<i64: 32, 96>}, {pipeline_mode = #tpu.pipeline_mode<synchronous>, transform_indices = @transform_4, window_bounds = array<i64: 32, 1>}, {transform_indices = @transform_5, window_bounds = array<i64: 1, 32, 32>}]} {
    %c0 = arith.constant 0 : index
    %c0_0 = arith.constant 0 : index
    %0 = vector.load %arg2[%c0, %c0_0] : memref<32x96xf32, #tpu.memory_space<vmem>>, vector<32x96xf32>
    %c0_1 = arith.constant 0 : index
    %c0_2 = arith.constant 0 : index
    %1 = vector.load %arg4[%c0_1, %c0_2] : memref<32x96xf32, #tpu.memory_space<vmem>>, vector<32x96xf32>
    %c0_3 = arith.constant 0 : index
    %c0_4 = arith.constant 0 : index
    %2 = vector.load %arg3[%c0_3, %c0_4] : memref<32x1xf32, #tpu.memory_space<vmem>>, vector<32x1xf32>
    %c0_5 = arith.constant 0 : index
    %c0_6 = arith.constant 0 : index
    %3 = vector.load %arg5[%c0_5, %c0_6] : memref<32x1xf32, #tpu.memory_space<vmem>>, vector<32x1xf32>
    %cst = arith.constant 0.000000e+00 : f32
    %4 = vector.broadcast %cst : f32 to vector<32x2xf32>
    %c0_7 = arith.constant 0 : index
    %c0_8 = arith.constant 0 : index
    %c0_9 = arith.constant 0 : index
    %5 = vector.load %arg1[%c0_7, %c0_8, %c0_9] : memref<2x32x16xf32, #tpu.memory_space<vmem>>, vector<1x32x16xf32>
    %6 = vector.shape_cast %5 : vector<1x32x16xf32> to vector<32x16xf32>
    %cst_10 = arith.constant 0.000000e+00 : f32
    %7 = vector.broadcast %cst_10 : f32 to vector<32x16xf32>
    %8 = arith.cmpf ogt, %6, %7 : vector<32x16xf32>
    %cst_11 = arith.constant 0.00999999977 : f32
    %9 = vector.broadcast %cst_11 : f32 to vector<32x16xf32>
    %10 = arith.mulf %9, %6 : vector<32x16xf32>
    %11 = arith.select %8, %6, %10 : vector<32x16xi1>, vector<32x16xf32>
    %12 = tpu.concatenate %4, %11, %4 in 1 : vector<32x2xf32>, vector<32x16xf32>, vector<32x2xf32> -> vector<32x20xf32>
    %13 = vector.extract_strided_slice %12 {offsets = [0, 0], sizes = [32, 16], strides = [1, 1]} : vector<32x20xf32> to vector<32x16xf32>
    %14 = vector.extract_strided_slice %12 {offsets = [0, 2], sizes = [32, 16], strides = [1, 1]} : vector<32x20xf32> to vector<32x16xf32>
    %15 = vector.extract_strided_slice %12 {offsets = [0, 4], sizes = [32, 16], strides = [1, 1]} : vector<32x20xf32> to vector<32x16xf32>
    %16 = tpu.concatenate %13, %14, %15 in 0 : vector<32x16xf32>, vector<32x16xf32>, vector<32x16xf32> -> vector<96x16xf32>
    %c1 = arith.constant 1 : index
    %c0_12 = arith.constant 0 : index
    %c0_13 = arith.constant 0 : index
    %17 = vector.load %arg1[%c1, %c0_12, %c0_13] : memref<2x32x16xf32, #tpu.memory_space<vmem>>, vector<1x32x16xf32>
    %18 = vector.shape_cast %17 : vector<1x32x16xf32> to vector<32x16xf32>
    %cst_14 = arith.constant 0.000000e+00 : f32
    %19 = vector.broadcast %cst_14 : f32 to vector<32x16xf32>
    %20 = arith.cmpf ogt, %18, %19 : vector<32x16xf32>
    %cst_15 = arith.constant 0.00999999977 : f32
    %21 = vector.broadcast %cst_15 : f32 to vector<32x16xf32>
    %22 = arith.mulf %21, %18 : vector<32x16xf32>
    %23 = arith.select %20, %18, %22 : vector<32x16xi1>, vector<32x16xf32>
    %24 = tpu.concatenate %4, %23, %4 in 1 : vector<32x2xf32>, vector<32x16xf32>, vector<32x2xf32> -> vector<32x20xf32>
    %25 = vector.extract_strided_slice %24 {offsets = [0, 0], sizes = [32, 16], strides = [1, 1]} : vector<32x20xf32> to vector<32x16xf32>
    %26 = vector.extract_strided_slice %24 {offsets = [0, 2], sizes = [32, 16], strides = [1, 1]} : vector<32x20xf32> to vector<32x16xf32>
    %27 = vector.extract_strided_slice %24 {offsets = [0, 4], sizes = [32, 16], strides = [1, 1]} : vector<32x20xf32> to vector<32x16xf32>
    %28 = tpu.concatenate %25, %26, %27 in 0 : vector<32x16xf32>, vector<32x16xf32>, vector<32x16xf32> -> vector<96x16xf32>
    %29 = tpu.concatenate %16, %28 in 1 : vector<96x16xf32>, vector<96x16xf32> -> vector<96x32xf32>
    %cst_16 = arith.constant dense<0.000000e+00> : vector<32x32xf32>
    %30 = tpu.matmul %0, %29, %cst_16 {dimension_numbers = #tpu.dot_dimension_numbers<[1], [0], [0], [1], [0, 0, 1, 1], [], []>} : vector<32x96xf32>, vector<96x32xf32>, vector<32x32xf32> -> vector<32x32xf32>
    %31 = vector.broadcast %2 : vector<32x1xf32> to vector<32x32xf32>
    %32 = arith.addf %30, %31 : vector<32x32xf32>
    %cst_17 = arith.constant 0.000000e+00 : f32
    %33 = vector.broadcast %cst_17 : f32 to vector<32x32xf32>
    %34 = arith.cmpf ogt, %32, %33 : vector<32x32xf32>
    %cst_18 = arith.constant 0.00999999977 : f32
    %35 = vector.broadcast %cst_18 : f32 to vector<32x32xf32>
    %36 = arith.mulf %35, %32 : vector<32x32xf32>
    %37 = arith.select %34, %32, %36 : vector<32x32xi1>, vector<32x32xf32>
    %cst_19 = arith.constant 0.000000e+00 : f32
    %38 = vector.broadcast %cst_19 : f32 to vector<32x1xf32>
    %39 = vector.extract_strided_slice %37 {offsets = [0, 0], sizes = [32, 16], strides = [1, 1]} : vector<32x32xf32> to vector<32x16xf32>
    %40 = tpu.concatenate %38, %39, %38 in 1 : vector<32x1xf32>, vector<32x16xf32>, vector<32x1xf32> -> vector<32x18xf32>
    %41 = vector.extract_strided_slice %40 {offsets = [0, 0], sizes = [32, 16], strides = [1, 1]} : vector<32x18xf32> to vector<32x16xf32>
    %42 = vector.extract_strided_slice %40 {offsets = [0, 1], sizes = [32, 16], strides = [1, 1]} : vector<32x18xf32> to vector<32x16xf32>
    %43 = vector.extract_strided_slice %40 {offsets = [0, 2], sizes = [32, 16], strides = [1, 1]} : vector<32x18xf32> to vector<32x16xf32>
    %44 = tpu.concatenate %41, %42, %43 in 0 : vector<32x16xf32>, vector<32x16xf32>, vector<32x16xf32> -> vector<96x16xf32>
    %45 = vector.extract_strided_slice %37 {offsets = [0, 16], sizes = [32, 16], strides = [1, 1]} : vector<32x32xf32> to vector<32x16xf32>
    %46 = tpu.concatenate %38, %45, %38 in 1 : vector<32x1xf32>, vector<32x16xf32>, vector<32x1xf32> -> vector<32x18xf32>
    %47 = vector.extract_strided_slice %46 {offsets = [0, 0], sizes = [32, 16], strides = [1, 1]} : vector<32x18xf32> to vector<32x16xf32>
    %48 = vector.extract_strided_slice %46 {offsets = [0, 1], sizes = [32, 16], strides = [1, 1]} : vector<32x18xf32> to vector<32x16xf32>
    %49 = vector.extract_strided_slice %46 {offsets = [0, 2], sizes = [32, 16], strides = [1, 1]} : vector<32x18xf32> to vector<32x16xf32>
    %50 = tpu.concatenate %47, %48, %49 in 0 : vector<32x16xf32>, vector<32x16xf32>, vector<32x16xf32> -> vector<96x16xf32>
    %51 = tpu.concatenate %44, %50 in 1 : vector<96x16xf32>, vector<96x16xf32> -> vector<96x32xf32>
    %cst_20 = arith.constant dense<0.000000e+00> : vector<32x32xf32>
    %52 = tpu.matmul %1, %51, %cst_20 {dimension_numbers = #tpu.dot_dimension_numbers<[1], [0], [0], [1], [0, 0, 1, 1], [], []>} : vector<32x96xf32>, vector<96x32xf32>, vector<32x32xf32> -> vector<32x32xf32>
    %53 = vector.broadcast %3 : vector<32x1xf32> to vector<32x32xf32>
    %54 = arith.addf %52, %53 : vector<32x32xf32>
    %c0_21 = arith.constant 0 : index
    %c0_22 = arith.constant 0 : index
    %c0_23 = arith.constant 0 : index
    %55 = vector.load %arg6[%c0_21, %c0_22, %c0_23] : memref<1x32x32xf32, #tpu.memory_space<vmem>>, vector<1x32x32xf32>
    %56 = vector.shape_cast %55 : vector<1x32x32xf32> to vector<32x32xf32>
    %57 = vector.shape_cast %54 : vector<32x32xf32> to vector<1x32x32xf32>
    tpu.vector_store %arg6[%c0_21, %c0_22, %c0_23], %57 {strides = array<i32>} : memref<1x32x32xf32, #tpu.memory_space<vmem>>, vector<1x32x32xf32>,
    return
  }
  func.func @transform_0(%arg0: i32) -> (i32, i32, i32) {
    %c0_i32 = arith.constant 0 : i32
    %c0_i32_0 = arith.constant 0 : i32
    %c0_i32_1 = arith.constant 0 : i32
    return %arg0, %c0_i32, %c0_i32_0 : i32, i32, i32
  }
  func.func @transform_1(%arg0: i32) -> (i32, i32) {
    %c0_i32 = arith.constant 0 : i32
    %c0_i32_0 = arith.constant 0 : i32
    %c0_i32_1 = arith.constant 0 : i32
    return %c0_i32, %c0_i32_0 : i32, i32
  }
  func.func @transform_2(%arg0: i32) -> (i32, i32) {
    %c0_i32 = arith.constant 0 : i32
    %c0_i32_0 = arith.constant 0 : i32
    %c0_i32_1 = arith.constant 0 : i32
    return %c0_i32, %c0_i32_0 : i32, i32
  }
  func.func @transform_3(%arg0: i32) -> (i32, i32) {
    %c0_i32 = arith.constant 0 : i32
    %c0_i32_0 = arith.constant 0 : i32
    %c0_i32_1 = arith.constant 0 : i32
    return %c0_i32, %c0_i32_0 : i32, i32
  }
  func.func @transform_4(%arg0: i32) -> (i32, i32) {
    %c0_i32 = arith.constant 0 : i32
    %c0_i32_0 = arith.constant 0 : i32
    %c0_i32_1 = arith.constant 0 : i32
    return %c0_i32, %c0_i32_0 : i32, i32
  }
  func.func @transform_5(%arg0: i32) -> (i32, i32, i32) {
    %c0_i32 = arith.constant 0 : i32
    %c0_i32_0 = arith.constant 0 : i32
    %c0_i32_1 = arith.constant 0 : i32
    return %arg0, %c0_i32, %c0_i32_0 : i32, i32, i32
  }
}

</mosaic_0001>

<llo_original>
// kernel: tpu_custom_call.1
$region0: #{tpu_custom_call.1}
  #allocation0 [shape = 'u32[]', space=smem, size = 0x4, offset = 0x4, fixed_abs, tag = 'smem constant byte address 0x4 - core index']
  #allocation1 [shape = 'u32[144,128]{1,0:T(1,128)}', space=vmem, size = 0x12000, scoped, tag = 'internal scratch']
  %s0 = inlined_call_operand.vmem [shape: f32[2,32,16], index: 0, kind: input, shape index: {}]
  %s1 = inlined_call_operand.vmem [shape: f32[32,96], index: 1, kind: input, shape index: {}]
  %s2 = inlined_call_operand.vmem [shape: f32[32,1], index: 2, kind: input, shape index: {}]
  %s3 = inlined_call_operand.vmem [shape: f32[32,96], index: 3, kind: input, shape index: {}]
  %s4 = inlined_call_operand.vmem [shape: f32[32,1], index: 4, kind: input, shape index: {}]
  %s5 = inlined_call_operand.hbm [shape: f32[1,32,32], index: 5, kind: output, shape index: {}]
  %s6 = sld [smem:[#allocation0]]
  $region30: #{tpu_custom_call.1} parent=0
    _
  %s8 = ssub.s32 1, %s6
  %s9 = scalar_select 0, %s8, %s6
  $region1: #{tpu_custom_call.1} parent=0
    #allocation2 [shape = 'u8[16384]{0}', space=vmem, size = 0x4000, scoped, tag = 'output window, operand 0, single buffered']
    #allocation3 [shape = 's32[1]{0}', space=sflag, size = 0x4, scoped, tag = 'scoped memory for tpu_custom_call.1']
    %10 = vsyncpa [#allocation3], 0
    // Predicated region
    $region2: #{tpu_custom_call.1} parent=1 // pred_check
      _
    $region3: #{tpu_custom_call.1} parent=1 // pred_check_branch
      %12 = sbr.rel (0) target = $region5
    $region4: #{tpu_custom_call.1} parent=1 // pred_region
      _
    $region5: #{tpu_custom_call.1} parent=1 // pred_fallthru
      _
    // Predicated region
    $region6: #{tpu_custom_call.1} parent=1 // pred_check
      _
    $region7: #{tpu_custom_call.1} parent=1 // pred_check_branch
      %14 = sbr.rel (0) target = $region9
    $region8: #{tpu_custom_call.1} parent=1 // pred_region
      _
    $region9: #{tpu_custom_call.1} parent=1 // pred_fallthru
      _
    // Predicated region
    $region10: #{tpu_custom_call.1} parent=1 // pred_check
      _
    $region11: #{tpu_custom_call.1} parent=1 // pred_check_branch
      %16 = sbr.rel (0) target = $region13
    $region12: #{tpu_custom_call.1} parent=1 // pred_region
      _
    $region13: #{tpu_custom_call.1} parent=1 // pred_fallthru
      _
    // Predicated region
    $region14: #{tpu_custom_call.1} parent=1 // pred_check
      _
    $region15: #{tpu_custom_call.1} parent=1 // pred_check_branch
      %18 = sbr.rel (0) target = $region17
    $region16: #{tpu_custom_call.1} parent=1 // pred_region
      _
    $region17: #{tpu_custom_call.1} parent=1 // pred_fallthru
      _
    // Predicated region
    $region18: #{tpu_custom_call.1} parent=1 // pred_check
      _
    $region19: #{tpu_custom_call.1} parent=1 // pred_check_branch
      %20 = sbr.rel (0) target = $region21
    $region20: #{tpu_custom_call.1} parent=1 // pred_region
      _
    $region21: #{tpu_custom_call.1} parent=1 // pred_fallthru
      _
    %v21 = vld [vmem:[%s1] sm:$0xff]
    %v22 = vld [vmem:[%s1 + $0x8] sm:$0xff]
    %v23 = vld [vmem:[%s1 + $0x10] sm:$0xff]
    %v24 = vld [vmem:[%s1 + $0x18] sm:$0xff]
    %v25 = vld [vmem:[%s3] sm:$0xff]
    %v26 = vld [vmem:[%s3 + $0x8] sm:$0xff]
    %v27 = vld [vmem:[%s3 + $0x10] sm:$0xff]
    %v28 = vld [vmem:[%s3 + $0x18] sm:$0xff]
    %v29 = vld [vmem:[%s2] sm:$0xff]
    %v30 = vld [vmem:[%s2 + $0x8] sm:$0xff]
    %v31 = vld [vmem:[%s2 + $0x10] sm:$0xff]
    %v32 = vld [vmem:[%s2 + $0x18] sm:$0xff]
    %v33 = vld [vmem:[%s4] sm:$0xff]
    %v34 = vld [vmem:[%s4 + $0x8] sm:$0xff]
    %v35 = vld [vmem:[%s4 + $0x10] sm:$0xff]
    %v36 = vld [vmem:[%s4 + $0x18] sm:$0xff]
    %v37 = vld [vmem:[%s0] sm:$0xff]
    %v38 = vld [vmem:[%s0 + $0x8] sm:$0xff]
    %v39 = vld [vmem:[%s0 + $0x10] sm:$0xff]
    %v40 = vld [vmem:[%s0 + $0x18] sm:$0xff]
    %vm41 = vcmp.gt.f32.partialorder %v37, 0.0
    %vm42 = vcmp.gt.f32.partialorder %v38, 0.0
    %vm43 = vcmp.gt.f32.partialorder %v39, 0.0
    %vm44 = vcmp.gt.f32.partialorder %v40, 0.0
    %v45 = vmul.f32 %v37, 0.01
    %v46 = vmul.f32 %v38, 0.01
    %v47 = vmul.f32 %v39, 0.01
    %v48 = vmul.f32 %v40, 0.01
    %v49 = vsel %vm41, %v37, %v45
    %v50 = vsel %vm42, %v38, %v46
    %v51 = vsel %vm43, %v39, %v47
    %v52 = vsel %vm44, %v40, %v48
    %57 = vrot.lane.b32.xlu0 %v49, 2
    %v58 = vpop.permute.xlu0 %57
    %59 = vrot.lane.b32.xlu0 %v50, 2
    %v60 = vpop.permute.xlu0 %59
    %61 = vrot.lane.b32.xlu0 %v51, 2
    %v62 = vpop.permute.xlu0 %61
    %63 = vrot.lane.b32.xlu0 %v52, 2
    %v64 = vpop.permute.xlu0 %63
    %vm69 = vcmask 15360
    %v70 = vsel %vm69, 0.0, %v58
    %v71 = vsel %vm69, 0.0, %v60
    %v72 = vsel %vm69, 0.0, %v62
    %v73 = vsel %vm69, 0.0, %v64
    %vm74 = vcmask 146432
    %v75 = vsel %vm74, %v70, 0.0
    %v76 = vsel %vm74, %v71, 0.0
    %v77 = vsel %vm74, %v72, 0.0
    %v78 = vsel %vm74, %v73, 0.0
    %83 = vrot.lane.b32.xlu0 %v75, 126
    %v84 = vpop.permute.xlu0 %83
    %85 = vrot.lane.b32.xlu0 %v76, 126
    %v86 = vpop.permute.xlu0 %85
    %87 = vrot.lane.b32.xlu0 %v77, 126
    %v88 = vpop.permute.xlu0 %87
    %89 = vrot.lane.b32.xlu0 %v78, 126
    %v90 = vpop.permute.xlu0 %89
    %95 = vrot.lane.b32.xlu0 %v75, 124
    %v96 = vpop.permute.xlu0 %95
    %97 = vrot.lane.b32.xlu0 %v76, 124
    %v98 = vpop.permute.xlu0 %97
    %99 = vrot.lane.b32.xlu0 %v77, 124
    %v100 = vpop.permute.xlu0 %99
    %101 = vrot.lane.b32.xlu0 %v78, 124
    %v102 = vpop.permute.xlu0 %101
    %s107 = scalar_lea.vmem %s0, 32
    %v108 = vld [vmem:[%s107] sm:$0xff]
    %v109 = vld [vmem:[%s107 + $0x8] sm:$0xff]
    %v110 = vld [vmem:[%s107 + $0x10] sm:$0xff]
    %v111 = vld [vmem:[%s107 + $0x18] sm:$0xff]
    %vm112 = vcmp.gt.f32.partialorder %v108, 0.0
    %vm113 = vcmp.gt.f32.partialorder %v109, 0.0
    %vm114 = vcmp.gt.f32.partialorder %v110, 0.0
    %vm115 = vcmp.gt.f32.partialorder %v111, 0.0
    %v116 = vmul.f32 %v108, 0.01
    %v117 = vmul.f32 %v109, 0.01
    %v118 = vmul.f32 %v110, 0.01
    %v119 = vmul.f32 %v111, 0.01
    %v120 = vsel %vm112, %v108, %v116
    %v121 = vsel %vm113, %v109, %v117
    %v122 = vsel %vm114, %v110, %v118
    %v123 = vsel %vm115, %v111, %v119
    %128 = vrot.lane.b32.xlu0 %v120, 2
    %v129 = vpop.permute.xlu0 %128
    %130 = vrot.lane.b32.xlu0 %v121, 2
    %v131 = vpop.permute.xlu0 %130
    %132 = vrot.lane.b32.xlu0 %v122, 2
    %v133 = vpop.permute.xlu0 %132
    %134 = vrot.lane.b32.xlu0 %v123, 2
    %v135 = vpop.permute.xlu0 %134
    %v140 = vsel %vm69, 0.0, %v129
    %v141 = vsel %vm69, 0.0, %v131
    %v142 = vsel %vm69, 0.0, %v133
    %v143 = vsel %vm69, 0.0, %v135
    %v144 = vsel %vm74, %v140, 0.0
    %v145 = vsel %vm74, %v141, 0.0
    %v146 = vsel %vm74, %v142, 0.0
    %v147 = vsel %vm74, %v143, 0.0
    %152 = vrot.lane.b32.xlu0 %v144, 126
    %v153 = vpop.permute.xlu0 %152
    %154 = vrot.lane.b32.xlu0 %v145, 126
    %v155 = vpop.permute.xlu0 %154
    %156 = vrot.lane.b32.xlu0 %v146, 126
    %v157 = vpop.permute.xlu0 %156
    %158 = vrot.lane.b32.xlu0 %v147, 126
    %v159 = vpop.permute.xlu0 %158
    %160 = vrot.lane.b32.xlu0 %v144, 124
    %v161 = vpop.permute.xlu0 %160
    %162 = vrot.lane.b32.xlu0 %v145, 124
    %v163 = vpop.permute.xlu0 %162
    %164 = vrot.lane.b32.xlu0 %v146, 124
    %v165 = vpop.permute.xlu0 %164
    %166 = vrot.lane.b32.xlu0 %v147, 124
    %v167 = vpop.permute.xlu0 %166
    %168 = vrot.lane.b32.xlu0 %v144, 16
    %v169 = vpop.permute.xlu0 %168
    %170 = vrot.lane.b32.xlu0 %v145, 16
    %v171 = vpop.permute.xlu0 %170
    %172 = vrot.lane.b32.xlu0 %v146, 16
    %v173 = vpop.permute.xlu0 %172
    %174 = vrot.lane.b32.xlu0 %v147, 16
    %v175 = vpop.permute.xlu0 %174
    %176 = vrot.lane.b32.xlu0 %v153, 16
    %v177 = vpop.permute.xlu0 %176
    %178 = vrot.lane.b32.xlu0 %v155, 16
    %v179 = vpop.permute.xlu0 %178
    %180 = vrot.lane.b32.xlu0 %v157, 16
    %v181 = vpop.permute.xlu0 %180
    %182 = vrot.lane.b32.xlu0 %v159, 16
    %v183 = vpop.permute.xlu0 %182
    %184 = vrot.lane.b32.xlu0 %v161, 16
    %v185 = vpop.permute.xlu0 %184
    %186 = vrot.lane.b32.xlu0 %v163, 16
    %v187 = vpop.permute.xlu0 %186
    %188 = vrot.lane.b32.xlu0 %v165, 16
    %v189 = vpop.permute.xlu0 %188
    %190 = vrot.lane.b32.xlu0 %v167, 16
    %v191 = vpop.permute.xlu0 %190
    %vm204 = vcmask 130048
    %v205 = vsel %vm204, %v75, %v169
    %v206 = vsel %vm204, %v76, %v171
    %v207 = vsel %vm204, %v77, %v173
    %v208 = vsel %vm204, %v78, %v175
    %v209 = vsel %vm204, %v84, %v177
    %v210 = vsel %vm204, %v86, %v179
    %v211 = vsel %vm204, %v88, %v181
    %v212 = vsel %vm204, %v90, %v183
    %v213 = vsel %vm204, %v96, %v185
    %v214 = vsel %vm204, %v98, %v187
    %v215 = vsel %vm204, %v100, %v189
    %v216 = vsel %vm204, %v102, %v191
    %218 = vset.pattern.permute.xlu0 0
    %219 = vperm.xlu0 %218, %v29
    %v220 = vpop.permute.xlu0 %219
    %223 = vset.pattern.permute.xlu0 0
    %224 = vperm.xlu0 %223, %v30
    %v225 = vpop.permute.xlu0 %224
    %228 = vset.pattern.permute.xlu0 0
    %229 = vperm.xlu0 %228, %v31
    %v230 = vpop.permute.xlu0 %229
    %233 = vset.pattern.permute.xlu0 0
    %234 = vperm.xlu0 %233, %v32
    %v235 = vpop.permute.xlu0 %234
    %vm237 = vcmask 785408
    %v239 = vsel %vm237, %v21, 0
    %v242 = vsel %vm237, %v22, 0
    %v245 = vsel %vm237, %v23, 0
    %v248 = vsel %vm237, %v24, 0
    %250 = vmatprep.subr.mxu0 0.0
    %251 = vmatpush1.msra.mxu0 0.0
    %252 = vmatprep.subr.mxu0 0.0
    %253 = vmatpush1.msra.mxu0 0.0
    %254 = vmatprep.subr.mxu0 0.0
    %255 = vmatpush1.msra.mxu0 0.0
    %256 = vmatprep.subr.mxu0 0.0
    %257 = vmatpush1.msra.mxu0 0.0
    %258 = vmatprep.subr.mxu0 0.0
    %259 = vmatpush1.msra.mxu0 %v216
    %260 = vmatprep.subr.mxu0 0.0
    %261 = vmatpush1.msra.mxu0 %v215
    %262 = vmatprep.subr.mxu0 0.0
    %263 = vmatpush1.msra.mxu0 %v214
    %264 = vmatprep.subr.mxu0 0.0
    %265 = vmatpush1.msra.mxu0 %v213
    %266 = vmatprep.subr.mxu0 0.0
    %267 = vmatpush1.msra.mxu0 %v212
    %268 = vmatprep.subr.mxu0 0.0
    %269 = vmatpush1.msra.mxu0 %v211
    %270 = vmatprep.subr.mxu0 0.0
    %271 = vmatpush1.msra.mxu0 %v210
    %272 = vmatprep.subr.mxu0 0.0
    %273 = vmatpush1.msra.mxu0 %v209
    %274 = vmatprep.subr.mxu0 0.0
    %275 = vmatpush1.msra.mxu0 %v208
    %276 = vmatprep.subr.mxu0 0.0
    %277 = vmatpush1.msra.mxu0 %v207
    %278 = vmatprep.subr.mxu0 0.0
    %279 = vmatpush1.msra.mxu0 %v206
    %280 = vmatprep.subr.mxu0 0.0
    %281 = vmatpush1.msra.mxu0 %v205
    %282 = vmatprep.subr.mxu0 0.0
    %283 = vmatpush2.msra.mxu0 0.0
    %284 = vmatprep.subr.mxu0 0.0
    %285 = vmatpush2.msra.mxu0 0.0
    %286 = vmatprep.subr.mxu0 0.0
    %287 = vmatpush2.msra.mxu0 0.0
    %288 = vmatprep.subr.mxu0 0.0
    %289 = vmatpush2.msra.mxu0 0.0
    %290 = vmatprep.subr.mxu0 0.0
    %291 = vmatpush2.msra.mxu0 0.0
    %292 = vmatprep.subr.mxu0 0.0
    %293 = vmatpush2.msra.mxu0 0.0
    %294 = vmatprep.subr.mxu0 0.0
    %295 = vmatpush2.msra.mxu0 0.0
    %296 = vmatprep.subr.mxu0 0.0
    %297 = vmatpush2.msra.mxu0 0.0
    %298 = vmatprep.subr.mxu0 0.0
    %299 = vmatpush2.msra.mxu0 0.0
    %300 = vmatprep.subr.mxu0 0.0
    %301 = vmatpush2.msra.mxu0 0.0
    %302 = vmatprep.subr.mxu0 0.0
    %303 = vmatpush2.msra.mxu0 0.0
    %304 = vmatprep.subr.mxu0 0.0
    %305 = vmatpush2.msra.mxu0 0.0
    %306 = vmatprep.subr.mxu0 0.0
    %307 = vmatpush2.msra.mxu0 0.0
    %308 = vmatprep.subr.mxu0 0.0
    %309 = vmatpush2.msra.mxu0 0.0
    %310 = vmatprep.subr.mxu0 0.0
    %311 = vmatpush2.msra.mxu0 0.0
    %312 = vmatprep.subr.mxu0 0.0
    %313 = vmatpush2.msra.mxu0 0.0
    %314 = vmatprep.mubr.f32.mxu0 0.0
    %315 = vmatmul.mubr.f32.gmra.mxu0 %v239
    %v316 = vpop.f32.mrf.mxu0
    %v317 = vadd.f32 %v220, %v316
    %v318 = vpop.f32.mrf.mxu0
    %319 = vmatprep.mubr.f32.mxu0 0.0
    %320 = vmatmul.mubr.f32.gmra.mxu0 %v242
    %v321 = vpop.f32.mrf.mxu0
    %v322 = vadd.f32 %v225, %v321
    %v323 = vpop.f32.mrf.mxu0
    %324 = vmatprep.mubr.f32.mxu0 0.0
    %325 = vmatmul.mubr.f32.gmra.mxu0 %v245
    %v326 = vpop.f32.mrf.mxu0
    %v327 = vadd.f32 %v230, %v326
    %v328 = vpop.f32.mrf.mxu0
    %329 = vmatprep.mubr.f32.mxu0 0.0
    %330 = vmatmul.mubr.f32.gmra.mxu0 %v248
    %v331 = vpop.f32.mrf.mxu0
    %v332 = vadd.f32 %v235, %v331
    %v333 = vpop.f32.mrf.mxu0
    %334 = vdwg.mxu0
    %vm335 = vcmp.gt.f32.partialorder %v317, 0.0
    %vm336 = vcmp.gt.f32.partialorder %v322, 0.0
    %vm337 = vcmp.gt.f32.partialorder %v327, 0.0
    %vm338 = vcmp.gt.f32.partialorder %v332, 0.0
    %v339 = vmul.f32 %v317, 0.01
    %v340 = vmul.f32 %v322, 0.01
    %v341 = vmul.f32 %v327, 0.01
    %v342 = vmul.f32 %v332, 0.01
    %v343 = vsel %vm335, %v317, %v339
    %v344 = vsel %vm336, %v322, %v340
    %v345 = vsel %vm337, %v327, %v341
    %v346 = vsel %vm338, %v332, %v342
    %351 = vrot.lane.b32.xlu0 %v343, 1
    %v352 = vpop.permute.xlu0 %351
    %353 = vrot.lane.b32.xlu0 %v344, 1
    %v354 = vpop.permute.xlu0 %353
    %355 = vrot.lane.b32.xlu0 %v345, 1
    %v356 = vpop.permute.xlu0 %355
    %357 = vrot.lane.b32.xlu0 %v346, 1
    %v358 = vpop.permute.xlu0 %357
    %vm363 = vcmask 7168
    %v364 = vsel %vm363, 0.0, %v352
    %v365 = vsel %vm363, 0.0, %v354
    %v366 = vsel %vm363, 0.0, %v356
    %v367 = vsel %vm363, 0.0, %v358
    %vm368 = vcmask 138240
    %v369 = vsel %vm368, %v364, 0.0
    %v370 = vsel %vm368, %v365, 0.0
    %v371 = vsel %vm368, %v366, 0.0
    %v372 = vsel %vm368, %v367, 0.0
    %377 = vrot.lane.b32.xlu0 %v369, 127
    %v378 = vpop.permute.xlu0 %377
    %379 = vrot.lane.b32.xlu0 %v370, 127
    %v380 = vpop.permute.xlu0 %379
    %381 = vrot.lane.b32.xlu0 %v371, 127
    %v382 = vpop.permute.xlu0 %381
    %383 = vrot.lane.b32.xlu0 %v372, 127
    %v384 = vpop.permute.xlu0 %383
    %389 = vrot.lane.b32.xlu0 %v369, 126
    %v390 = vpop.permute.xlu0 %389
    %391 = vrot.lane.b32.xlu0 %v370, 126
    %v392 = vpop.permute.xlu0 %391
    %393 = vrot.lane.b32.xlu0 %v371, 126
    %v394 = vpop.permute.xlu0 %393
    %395 = vrot.lane.b32.xlu0 %v372, 126
    %v396 = vpop.permute.xlu0 %395
    %401 = vrot.lane.b32.xlu0 %v343, 113
    %v402 = vpop.permute.xlu0 %401
    %403 = vrot.lane.b32.xlu0 %v344, 113
    %v404 = vpop.permute.xlu0 %403
    %405 = vrot.lane.b32.xlu0 %v345, 113
    %v406 = vpop.permute.xlu0 %405
    %407 = vrot.lane.b32.xlu0 %v346, 113
    %v408 = vpop.permute.xlu0 %407
    %v413 = vsel %vm363, 0.0, %v402
    %v414 = vsel %vm363, 0.0, %v404
    %v415 = vsel %vm363, 0.0, %v406
    %v416 = vsel %vm363, 0.0, %v408
    %v417 = vsel %vm368, %v413, 0.0
    %v418 = vsel %vm368, %v414, 0.0
    %v419 = vsel %vm368, %v415, 0.0
    %v420 = vsel %vm368, %v416, 0.0
    %425 = vrot.lane.b32.xlu0 %v417, 127
    %v426 = vpop.permute.xlu0 %425
    %427 = vrot.lane.b32.xlu0 %v418, 127
    %v428 = vpop.permute.xlu0 %427
    %429 = vrot.lane.b32.xlu0 %v419, 127
    %v430 = vpop.permute.xlu0 %429
    %431 = vrot.lane.b32.xlu0 %v420, 127
    %v432 = vpop.permute.xlu0 %431
    %433 = vrot.lane.b32.xlu0 %v417, 126
    %v434 = vpop.permute.xlu0 %433
    %435 = vrot.lane.b32.xlu0 %v418, 126
    %v436 = vpop.permute.xlu0 %435
    %437 = vrot.lane.b32.xlu0 %v419, 126
    %v438 = vpop.permute.xlu0 %437
    %439 = vrot.lane.b32.xlu0 %v420, 126
    %v440 = vpop.permute.xlu0 %439
    %441 = vrot.lane.b32.xlu0 %v417, 16
    %v442 = vpop.permute.xlu0 %441
    %443 = vrot.lane.b32.xlu0 %v418, 16
    %v444 = vpop.permute.xlu0 %443
    %445 = vrot.lane.b32.xlu0 %v419, 16
    %v446 = vpop.permute.xlu0 %445
    %447 = vrot.lane.b32.xlu0 %v420, 16
    %v448 = vpop.permute.xlu0 %447
    %449 = vrot.lane.b32.xlu0 %v426, 16
    %v450 = vpop.permute.xlu0 %449
    %451 = vrot.lane.b32.xlu0 %v428, 16
    %v452 = vpop.permute.xlu0 %451
    %453 = vrot.lane.b32.xlu0 %v430, 16
    %v454 = vpop.permute.xlu0 %453
    %455 = vrot.lane.b32.xlu0 %v432, 16
    %v456 = vpop.permute.xlu0 %455
    %457 = vrot.lane.b32.xlu0 %v434, 16
    %v458 = vpop.permute.xlu0 %457
    %459 = vrot.lane.b32.xlu0 %v436, 16
    %v460 = vpop.permute.xlu0 %459
    %461 = vrot.lane.b32.xlu0 %v438, 16
    %v462 = vpop.permute.xlu0 %461
    %463 = vrot.lane.b32.xlu0 %v440, 16
    %v464 = vpop.permute.xlu0 %463
    %v477 = vsel %vm204, %v369, %v442
    %v478 = vsel %vm204, %v370, %v444
    %v479 = vsel %vm204, %v371, %v446
    %v480 = vsel %vm204, %v372, %v448
    %v481 = vsel %vm204, %v378, %v450
    %v482 = vsel %vm204, %v380, %v452
    %v483 = vsel %vm204, %v382, %v454
    %v484 = vsel %vm204, %v384, %v456
    %v485 = vsel %vm204, %v390, %v458
    %v486 = vsel %vm204, %v392, %v460
    %v487 = vsel %vm204, %v394, %v462
    %v488 = vsel %vm204, %v396, %v464
    %490 = vset.pattern.permute.xlu0 0
    %491 = vperm.xlu0 %490, %v33
    %v492 = vpop.permute.xlu0 %491
    %495 = vset.pattern.permute.xlu0 0
    %496 = vperm.xlu0 %495, %v34
    %v497 = vpop.permute.xlu0 %496
    %500 = vset.pattern.permute.xlu0 0
    %501 = vperm.xlu0 %500, %v35
    %v502 = vpop.permute.xlu0 %501
    %505 = vset.pattern.permute.xlu0 0
    %506 = vperm.xlu0 %505, %v36
    %v507 = vpop.permute.xlu0 %506
    %v510 = vsel %vm237, %v25, 0
    %v513 = vsel %vm237, %v26, 0
    %v516 = vsel %vm237, %v27, 0
    %v519 = vsel %vm237, %v28, 0
    %521 = vmatprep.subr.mxu0 0.0
    %522 = vmatpush1.msra.mxu0 0.0
    %523 = vmatprep.subr.mxu0 0.0
    %524 = vmatpush1.msra.mxu0 0.0
    %525 = vmatprep.subr.mxu0 0.0
    %526 = vmatpush1.msra.mxu0 0.0
    %527 = vmatprep.subr.mxu0 0.0
    %528 = vmatpush1.msra.mxu0 0.0
    %529 = vmatprep.subr.mxu0 0.0
    %530 = vmatpush1.msra.mxu0 %v488
    %531 = vmatprep.subr.mxu0 0.0
    %532 = vmatpush1.msra.mxu0 %v487
    %533 = vmatprep.subr.mxu0 0.0
    %534 = vmatpush1.msra.mxu0 %v486
    %535 = vmatprep.subr.mxu0 0.0
    %536 = vmatpush1.msra.mxu0 %v485
    %537 = vmatprep.subr.mxu0 0.0
    %538 = vmatpush1.msra.mxu0 %v484
    %539 = vmatprep.subr.mxu0 0.0
    %540 = vmatpush1.msra.mxu0 %v483
    %541 = vmatprep.subr.mxu0 0.0
    %542 = vmatpush1.msra.mxu0 %v482
    %543 = vmatprep.subr.mxu0 0.0
    %544 = vmatpush1.msra.mxu0 %v481
    %545 = vmatprep.subr.mxu0 0.0
    %546 = vmatpush1.msra.mxu0 %v480
    %547 = vmatprep.subr.mxu0 0.0
    %548 = vmatpush1.msra.mxu0 %v479
    %549 = vmatprep.subr.mxu0 0.0
    %550 = vmatpush1.msra.mxu0 %v478
    %551 = vmatprep.subr.mxu0 0.0
    %552 = vmatpush1.msra.mxu0 %v477
    %553 = vmatprep.subr.mxu0 0.0
    %554 = vmatpush2.msra.mxu0 0.0
    %555 = vmatprep.subr.mxu0 0.0
    %556 = vmatpush2.msra.mxu0 0.0
    %557 = vmatprep.subr.mxu0 0.0
    %558 = vmatpush2.msra.mxu0 0.0
    %559 = vmatprep.subr.mxu0 0.0
    %560 = vmatpush2.msra.mxu0 0.0
    %561 = vmatprep.subr.mxu0 0.0
    %562 = vmatpush2.msra.mxu0 0.0
    %563 = vmatprep.subr.mxu0 0.0
    %564 = vmatpush2.msra.mxu0 0.0
    %565 = vmatprep.subr.mxu0 0.0
    %566 = vmatpush2.msra.mxu0 0.0
    %567 = vmatprep.subr.mxu0 0.0
    %568 = vmatpush2.msra.mxu0 0.0
    %569 = vmatprep.subr.mxu0 0.0
    %570 = vmatpush2.msra.mxu0 0.0
    %571 = vmatprep.subr.mxu0 0.0
    %572 = vmatpush2.msra.mxu0 0.0
    %573 = vmatprep.subr.mxu0 0.0
    %574 = vmatpush2.msra.mxu0 0.0
    %575 = vmatprep.subr.mxu0 0.0
    %576 = vmatpush2.msra.mxu0 0.0
    %577 = vmatprep.subr.mxu0 0.0
    %578 = vmatpush2.msra.mxu0 0.0
    %579 = vmatprep.subr.mxu0 0.0
    %580 = vmatpush2.msra.mxu0 0.0
    %581 = vmatprep.subr.mxu0 0.0
    %582 = vmatpush2.msra.mxu0 0.0
    %583 = vmatprep.subr.mxu0 0.0
    %584 = vmatpush2.msra.mxu0 0.0
    %585 = vmatprep.mubr.f32.mxu0 0.0
    %586 = vmatmul.mubr.f32.gmra.mxu0 %v510
    %v587 = vpop.f32.mrf.mxu0
    %v588 = vadd.f32 %v492, %v587
    %v589 = vpop.f32.mrf.mxu0
    %590 = vmatprep.mubr.f32.mxu0 0.0
    %591 = vmatmul.mubr.f32.gmra.mxu0 %v513
    %v592 = vpop.f32.mrf.mxu0
    %v593 = vadd.f32 %v497, %v592
    %v594 = vpop.f32.mrf.mxu0
    %595 = vmatprep.mubr.f32.mxu0 0.0
    %596 = vmatmul.mubr.f32.gmra.mxu0 %v516
    %v597 = vpop.f32.mrf.mxu0
    %v598 = vadd.f32 %v502, %v597
    %v599 = vpop.f32.mrf.mxu0
    %600 = vmatprep.mubr.f32.mxu0 0.0
    %601 = vmatmul.mubr.f32.gmra.mxu0 %v519
    %v602 = vpop.f32.mrf.mxu0
    %v603 = vadd.f32 %v507, %v602
    %v604 = vpop.f32.mrf.mxu0
    %605 = vdwg.mxu0
    %vm606 = vcmask 261120
    %607 = vst.msk [vmem:[#allocation2] sm:$0xff] %vm606, %v588
    %608 = vst.msk [vmem:[#allocation2 + $0x8] sm:$0xff] %vm606, %v593
    %609 = vst.msk [vmem:[#allocation2 + $0x10] sm:$0xff] %vm606, %v598
    %610 = vst.msk [vmem:[#allocation2 + $0x18] sm:$0xff] %vm606, %v603
    // Predicated region
    $region22: #{tpu_custom_call.1} parent=1 // pred_check
      _
    $region23: #{tpu_custom_call.1} parent=1 // pred_check_branch
      %612 = sbr.rel (0) target = $region25
    $region24: #{tpu_custom_call.1} parent=1 // pred_region
      %s614 = ssub.s32 512, 512
      %615 = vsyncadd [#allocation3], %s614
      %s616 = sshll.u32 [#allocation2], 4
      %s617 = int_to_ptr.vmem [resolvable:$true] %s616
      %622 = dma.vmem_to_hbm [thread:$0]  %s617, 512, %s5, [#allocation3], 128, 128, 8
    $region25: #{tpu_custom_call.1} parent=1 // pred_fallthru
      _
    // Predicated region
    $region26: #{tpu_custom_call.1} parent=1 // pred_check
      _
    $region27: #{tpu_custom_call.1} parent=1 // pred_check_branch
      %624 = sbr.rel (0) target = $region29
    $region28: #{tpu_custom_call.1} parent=1 // pred_region
      %625 = dma.done [#allocation3], 512
    $region29: #{tpu_custom_call.1} parent=1 // pred_fallthru
      _
    %626 = vsyncpa [#allocation3], 1

</llo_original>
